<compile_context>
chip_gen: v5e
topology: v5e:2x2
jax: 0.10.0
libtpu: 0.0.40
codegen_flags: <defaults>
</compile_context>

<pallas_src>
import functools

import jax
import jax.numpy as jnp
from jax.experimental import pallas as pl
from jax.experimental.pallas import tpu as pltpu

# ---------------------------------------------------------------------------
# Problem sizes (from the module: dims = [3, 32, 32, 1])
# ---------------------------------------------------------------------------
IN_DIM = 3
HIDDEN = 32
OUT_DIM = 1

# Compact packed-parameter slab, lane width = HIDDEN (=32):
#   rows 0:3    w1   (3, 32)
#   row  3      b1   (1, 32)
#   row  4      b2   (1, 32)
#   row  5      w3^T (1, 32)
#   elem [6,0]  b3   scalar
#   rows 8:40   w2   (32, 32)   (8-row aligned)
W1_ROW, B1_ROW, B2_ROW, W3_ROW, B3_ROW, W2_ROW = 0, 3, 4, 5, 6, 8
SLAB_ROWS = 40


def _softplus(z):
    # Numerically stable softplus using only exp/log (EUP-friendly):
    #   softplus(z) = max(z, 0) + log(1 + exp(-|z|))
    return jnp.maximum(z, 0.0) + jnp.log(1.0 + jnp.exp(-jnp.abs(z)))


# ---------------------------------------------------------------------------
# Kernel A: single evaluation (matches the module forward exactly, (1,3)->(1,))
# ---------------------------------------------------------------------------
def mlp_single_kernel(x_ref, p_ref, o_ref):
    # x_ref: SMEM (3,) scalars; p_ref: VMEM (40, 32); o_ref: SMEM (1,).
    x0, x1, x2 = x_ref[0], x_ref[1], x_ref[2]

    # ----- Layer 1: scalar-x-vector MACs on the VPU (no lane splats) -------
    w1 = p_ref[W1_ROW:W1_ROW + IN_DIM, :]                 # (3, 32)
    b1 = p_ref[B1_ROW:B1_ROW + 1, :]                      # (1, 32)
    h1 = b1 + x0 * w1[0:1, :] + x1 * w1[1:2, :] + x2 * w1[2:3, :]   # (1, 32)
    h1 = jnp.maximum(h1, 0.0)

    # ----- Layer 2 (32x32): MXU.  Broadcast the single row to a full
    # sublane tile (still one vreg) to keep the matmul shape MXU-friendly. --
    w2 = p_ref[W2_ROW:W2_ROW + HIDDEN, :]                 # (32, 32)
    b2 = p_ref[B2_ROW:B2_ROW + 1, :]                      # (1, 32)
    h1_8 = jnp.broadcast_to(h1, (8, HIDDEN))              # (8, 32)
    h2 = jnp.dot(h1_8, w2, preferred_element_type=jnp.float32) + b2
    h2 = jnp.maximum(h2, 0.0)                             # (8, 32), rows equal

    # ----- Output layer + softplus: lane reduce on row 0, scalar -> SMEM ---
    w3t = p_ref[W3_ROW:W3_ROW + 1, :]                     # (1, 32) == w3^T
    b3 = p_ref[B3_ROW:B3_ROW + 1, 0:1]                    # (1, 1)
    z = jnp.sum(h2[0:1, :] * w3t, axis=-1, keepdims=True) + b3       # (1, 1)
    o_ref[0] = jnp.sum(_softplus(z))                      # (1,1) -> scalar


# ---------------------------------------------------------------------------
# Kernel B: fused batched evaluation ((B,3) -> (B,)), slab VMEM-resident
# ---------------------------------------------------------------------------
def mlp_batched_kernel(x_ref, p_ref, o_ref):
    # x_ref: (TM, 3) VMEM; p_ref: (40, 32) VMEM (constant index_map,
    # DMA'd once and kept resident); o_ref: (TM, 1) VMEM.
    x = x_ref[...]                                        # (TM, 3)

    w1 = p_ref[W1_ROW:W1_ROW + IN_DIM, :]                 # (3, 32)
    b1 = p_ref[B1_ROW:B1_ROW + 1, :]                      # (1, 32)
    h1 = jnp.maximum(
        jnp.dot(x, w1, preferred_element_type=jnp.float32) + b1, 0.0)

    w2 = p_ref[W2_ROW:W2_ROW + HIDDEN, :]                 # (32, 32)
    b2 = p_ref[B2_ROW:B2_ROW + 1, :]                      # (1, 32)
    h2 = jnp.maximum(
        jnp.dot(h1, w2, preferred_element_type=jnp.float32) + b2, 0.0)

    w3t = p_ref[W3_ROW:W3_ROW + 1, :]                     # (1, 32)
    b3 = p_ref[B3_ROW:B3_ROW + 1, 0:1]                    # (1, 1)
    z = jnp.sum(h2 * w3t, axis=-1, keepdims=True) + b3    # (TM, 1)
    o_ref[...] = _softplus(z)


# ---------------------------------------------------------------------------
# One-time parameter packing (done at init, NOT per forward call)
# ---------------------------------------------------------------------------
def pack_params(params):
    """Pack (w1,b1,w2,b2,w3,b3) into a single compact (40, 32) f32 slab."""
    w1, b1, w2, b2, w3, b3 = params
    slab = jnp.zeros((SLAB_ROWS, HIDDEN), jnp.float32)
    slab = slab.at[W1_ROW:W1_ROW + IN_DIM, :].set(w1.astype(jnp.float32))
    slab = slab.at[B1_ROW, :].set(b1.astype(jnp.float32))
    slab = slab.at[B2_ROW, :].set(b2.astype(jnp.float32))
    slab = slab.at[W3_ROW, :].set(w3[:, 0].astype(jnp.float32))
    slab = slab.at[B3_ROW, 0].set(b3[0].astype(jnp.float32))
    slab = slab.at[W2_ROW:W2_ROW + HIDDEN, :].set(w2.astype(jnp.float32))
    return slab


# ---------------------------------------------------------------------------
# Wrappers
# ---------------------------------------------------------------------------
@jax.jit
def mlp_decision_forward(features, param_slab):
    """features: (1, 3) f32, param_slab: packed (40, 32) f32 -> (1,) f32."""
    x = features.reshape(IN_DIM).astype(jnp.float32)      # (3,) -> SMEM
    out = pl.pallas_call(
        mlp_single_kernel,
        out_shape=jax.ShapeDtypeStruct((OUT_DIM,), jnp.float32),
        in_specs=[
            pl.BlockSpec(memory_space=pltpu.MemorySpace.SMEM),
            pl.BlockSpec((SLAB_ROWS, HIDDEN), lambda: (0, 0)),
        ],
        out_specs=pl.BlockSpec(memory_space=pltpu.MemorySpace.SMEM),
        cost_estimate=pl.CostEstimate(
            flops=2304, transcendentals=2, bytes_accessed=5136),
    )(x, param_slab)
    return out   # (1,), matches .view(-1) of a (1, 1) tensor


@functools.partial(jax.jit, static_argnames=("tm",))
def mlp_decision_forward_batched(features, param_slab, *, tm=8):
    """Fused evaluation over B candidates: (B, 3) -> (B,).

    One pallas_call with a "parallel" grid over batch tiles; the param slab
    uses a constant index_map so it is DMA'd once and stays VMEM-resident.
    For real workloads pick tm in 256..1024 (multiple of 8).
    """
    B = features.shape[0]
    assert B % tm == 0, (B, tm)
    out = pl.pallas_call(
        mlp_batched_kernel,
        grid=(B // tm,),
        out_shape=jax.ShapeDtypeStruct((B, OUT_DIM), jnp.float32),
        in_specs=[
            pl.BlockSpec((tm, IN_DIM), lambda i: (i, 0)),
            pl.BlockSpec((SLAB_ROWS, HIDDEN), lambda i: (0, 0)),  # resident
        ],
        out_specs=pl.BlockSpec((tm, OUT_DIM), lambda i: (i, 0)),
        compiler_params=pltpu.CompilerParams(
            dimension_semantics=("parallel",)),
        cost_estimate=pl.CostEstimate(
            flops=2304 * B, transcendentals=2 * B,
            bytes_accessed=5120 + 16 * B),
    )(features.astype(jnp.float32), param_slab)
    return out.reshape(-1)


# ---------------------------------------------------------------------------
# Deterministic parameter init (PyTorch nn.Linear style: U(-1/sqrt(fan_in), .))
# Weights stored as (in, out).
# ---------------------------------------------------------------------------
def init_params(key):
    def linear(key, fan_in, fan_out):
        kw, kb = jax.random.split(key)
        bound = 1.0 / jnp.sqrt(float(fan_in))
        w = jax.random.uniform(kw, (fan_in, fan_out), jnp.float32, -bound, bound)
        b = jax.random.uniform(kb, (fan_out,), jnp.float32, -bound, bound)
        return w, b

    k1, k2, k3 = jax.random.split(key, 3)
    w1, b1 = linear(k1, IN_DIM, HIDDEN)
    w2, b2 = linear(k2, HIDDEN, HIDDEN)
    w3, b3 = linear(k3, HIDDEN, OUT_DIM)
    return (w1, b1, w2, b2, w3, b3)


def reference_forward(features, params):
    """Pure-JAX reference for correctness check (works for (1,3) and (B,3))."""
    w1, b1, w2, b2, w3, b3 = params
    h1 = jnp.maximum(features @ w1 + b1, 0.0)
    h2 = jnp.maximum(h1 @ w2 + b2, 0.0)
    out = h2 @ w3 + b3
    return jax.nn.softplus(out).reshape(-1)


if __name__ == "__main__":
    key = jax.random.PRNGKey(0)
    pkey, xkey, bkey = jax.random.split(key, 3)

    params = init_params(pkey)
    param_slab = pack_params(params)          # done ONCE, at "init" time

    # --- single evaluation, exactly the module's forward: (1, 3) -> (1,) ---
    features = jax.random.normal(xkey, (1, 3), jnp.float32)
    out = jax.block_until_ready(mlp_decision_forward(features, param_slab))
    ref = reference_forward(features, params)
    assert out.shape == (1,), f"bad output shape {out.shape}"
    assert jnp.allclose(out, ref, atol=1e-5, rtol=1e-5), (out, ref)

    # --- fused batched evaluation (many candidates in ONE pallas_call) -----
    B = 16
    feats_b = jax.random.normal(bkey, (B, 3), jnp.float32)
    out_b = jax.block_until_ready(
        mlp_decision_forward_batched(feats_b, param_slab, tm=8))
    ref_b = reference_forward(feats_b, params)
    assert out_b.shape == (B,), f"bad batched output shape {out_b.shape}"
    assert jnp.allclose(out_b, ref_b, atol=1e-5, rtol=1e-5), (out_b, ref_b)

    print("KERNEL_OK")
</pallas_src>

<mosaic_0001>
module attributes {stable_mosaic.version = 11 : i64} {
  func.func @mlp_single_kernel(%arg0: memref<3xf32, #tpu.memory_space<smem>>, %arg1: memref<40x32xf32, #tpu.memory_space<vmem>>, %arg2: memref<1xf32, #tpu.memory_space<smem>>) attributes {dimension_semantics = [], scalar_prefetch = 0 : i64, scratch_operands = 0 : i64, tpu.core_type = #tpu.core_type<tc>} {
    %c0 = arith.constant 0 : index
    %0 = memref.load %arg0[%c0] : memref<3xf32, #tpu.memory_space<smem>>
    %c1 = arith.constant 1 : index
    %1 = memref.load %arg0[%c1] : memref<3xf32, #tpu.memory_space<smem>>
    %c2 = arith.constant 2 : index
    %2 = memref.load %arg0[%c2] : memref<3xf32, #tpu.memory_space<smem>>
    %c0_0 = arith.constant 0 : index
    %c0_1 = arith.constant 0 : index
    %3 = vector.load %arg1[%c0_0, %c0_1] : memref<40x32xf32, #tpu.memory_space<vmem>>, vector<3x32xf32>
    %c3 = arith.constant 3 : index
    %c0_2 = arith.constant 0 : index
    %4 = vector.load %arg1[%c3, %c0_2] : memref<40x32xf32, #tpu.memory_space<vmem>>, vector<1x32xf32>
    %5 = vector.extract_strided_slice %3 {offsets = [0, 0], sizes = [1, 32], strides = [1, 1]} : vector<3x32xf32> to vector<1x32xf32>
    %6 = vector.broadcast %0 : f32 to vector<1x32xf32>
    %7 = arith.mulf %6, %5 : vector<1x32xf32>
    %8 = arith.addf %4, %7 : vector<1x32xf32>
    %9 = vector.extract_strided_slice %3 {offsets = [1, 0], sizes = [1, 32], strides = [1, 1]} : vector<3x32xf32> to vector<1x32xf32>
    %10 = vector.broadcast %1 : f32 to vector<1x32xf32>
    %11 = arith.mulf %10, %9 : vector<1x32xf32>
    %12 = arith.addf %8, %11 : vector<1x32xf32>
    %13 = vector.extract_strided_slice %3 {offsets = [2, 0], sizes = [1, 32], strides = [1, 1]} : vector<3x32xf32> to vector<1x32xf32>
    %14 = vector.broadcast %2 : f32 to vector<1x32xf32>
    %15 = arith.mulf %14, %13 : vector<1x32xf32>
    %16 = arith.addf %12, %15 : vector<1x32xf32>
    %cst = arith.constant 0.000000e+00 : f32
    %17 = vector.broadcast %cst : f32 to vector<1x32xf32>
    %18 = arith.maximumf %16, %17 : vector<1x32xf32>
    %c8 = arith.constant 8 : index
    %c0_3 = arith.constant 0 : index
    %19 = vector.load %arg1[%c8, %c0_3] : memref<40x32xf32, #tpu.memory_space<vmem>>, vector<32x32xf32>
    %c4 = arith.constant 4 : index
    %c0_4 = arith.constant 0 : index
    %20 = vector.load %arg1[%c4, %c0_4] : memref<40x32xf32, #tpu.memory_space<vmem>>, vector<1x32xf32>
    %21 = vector.shape_cast %18 : vector<1x32xf32> to vector<1x32xf32>
    %22 = vector.broadcast %21 : vector<1x32xf32> to vector<8x32xf32>
    %cst_5 = arith.constant dense<0.000000e+00> : vector<8x32xf32>
    %23 = tpu.matmul %22, %19, %cst_5 {dimension_numbers = #tpu.dot_dimension_numbers<[1], [0], [0], [1], [0, 0, 1, 1], [], []>} : vector<8x32xf32>, vector<32x32xf32>, vector<8x32xf32> -> vector<8x32xf32>
    %24 = vector.broadcast %20 : vector<1x32xf32> to vector<8x32xf32>
    %25 = arith.addf %23, %24 : vector<8x32xf32>
    %cst_6 = arith.constant 0.000000e+00 : f32
    %26 = vector.broadcast %cst_6 : f32 to vector<8x32xf32>
    %27 = arith.maximumf %25, %26 : vector<8x32xf32>
    %c5 = arith.constant 5 : index
    %c0_7 = arith.constant 0 : index
    %28 = vector.load %arg1[%c5, %c0_7] : memref<40x32xf32, #tpu.memory_space<vmem>>, vector<1x32xf32>
    %c6 = arith.constant 6 : index
    %c0_8 = arith.constant 0 : index
    %29 = vector.load %arg1[%c6, %c0_8] : memref<40x32xf32, #tpu.memory_space<vmem>>, vector<1x1xf32>
    %30 = vector.extract_strided_slice %27 {offsets = [0, 0], sizes = [1, 32], strides = [1, 1]} : vector<8x32xf32> to vector<1x32xf32>
    %31 = arith.mulf %30, %28 : vector<1x32xf32>
    %cst_9 = arith.constant dense<0.000000e+00> : vector<1xf32>
    %32 = vector.multi_reduction <add>, %31, %cst_9 [1] : vector<1x32xf32> to vector<1xf32>
    %33 = vector.shape_cast %32 : vector<1xf32> to vector<1x1xf32>
    %34 = arith.addf %33, %29 : vector<1x1xf32>
    %cst_10 = arith.constant 0.000000e+00 : f32
    %35 = vector.broadcast %cst_10 : f32 to vector<1x1xf32>
    %36 = arith.maximumf %34, %35 : vector<1x1xf32>
    %37 = math.absf %34 : vector<1x1xf32>
    %cst_11 = arith.constant 0.000000e+00 : f32
    %38 = vector.broadcast %cst_11 : f32 to vector<1x1xf32>
    %39 = arith.subf %38, %37 : vector<1x1xf32>
    %40 = math.exp %39 : vector<1x1xf32>
    %cst_12 = arith.constant 1.000000e+00 : f32
    %41 = vector.broadcast %cst_12 : f32 to vector<1x1xf32>
    %42 = arith.addf %41, %40 : vector<1x1xf32>
    %43 = math.log %42 : vector<1x1xf32>
    %44 = arith.addf %36, %43 : vector<1x1xf32>
    %45 = vector.shape_cast %44 : vector<1x1xf32> to vector<1x1x1xf32>
    %cst_13 = arith.constant dense<0.000000e+00> : vector<1xf32>
    %46 = vector.multi_reduction <add>, %45, %cst_13 [1, 2] : vector<1x1x1xf32> to vector<1xf32>
    %47 = vector.shape_cast %46 : vector<1xf32> to vector<1x1x1xf32>
    %48 = vector.extract %47[0, 0, 0] : f32 from vector<1x1x1xf32>
    %c0_14 = arith.constant 0 : index
    %49 = memref.load %arg2[%c0_14] : memref<1xf32, #tpu.memory_space<smem>>
    memref.store %48, %arg2[%c0_14] : memref<1xf32, #tpu.memory_space<smem>>
    return
  }
}

</mosaic_0001>

<llo_original>
// kernel: mlp_decision_forward.1
$region0: #{mlp_decision_forward.1}
  #allocation0 [shape = 'u32[]', space=smem, size = 0x4, offset = 0x4, fixed_abs, tag = 'smem constant byte address 0x4 - core index']
  #allocation1 [shape = 'u32[72,128]{1,0:T(1,128)}', space=vmem, size = 0x9000, scoped, tag = 'internal scratch']
  %s0 = inlined_call_operand.vmem [shape: f32[3], index: 0, kind: input, shape index: {}]
  %s1 = inlined_call_operand.vmem [shape: f32[40,32], index: 1, kind: input, shape index: {}]
  %s2 = inlined_call_operand.hbm [shape: f32[1], index: 2, kind: output, shape index: {}]
  %s3 = sld [smem:[#allocation0]]
  $region22: #{mlp_decision_forward.1} parent=0
    _
  %s5 = ssub.s32 1, %s3
  %s6 = scalar_select 0, %s5, %s3
  $region1: #{mlp_decision_forward.1} parent=0
    #allocation2 [shape = 'u8[512]{0}', space=smem, size = 0x200, scoped, tag = 'input window, operand 0, single buffered']
    #allocation3 [shape = 's32[1]{0}', space=sflag, size = 0x4, scoped, tag = 'scoped memory for mlp_decision_forward.1']
    #allocation4 [shape = 's32[1]{0}', space=sflag, size = 0x4, scoped, tag = 'scoped memory for mlp_decision_forward.1']
    #allocation5 [shape = 'u8[512]{0}', space=smem, size = 0x200, scoped, tag = 'output window, operand 0, single buffered']
    %7 = vsyncpa [#allocation4], 0
    %8 = vsyncpa [#allocation3], 0
    // Predicated region
    $region2: #{mlp_decision_forward.1} parent=1 // pred_check
      _
    $region3: #{mlp_decision_forward.1} parent=1 // pred_check_branch
      %10 = sbr.rel (0) target = $region5
    $region4: #{mlp_decision_forward.1} parent=1 // pred_region
      %12 = vsyncadd [#allocation4], 0
      %s14 = sshll.u32 %s0, 4
      %s15 = int_to_ptr.vmem [resolvable:$true] %s14
      %17 = dma.vmem_to_smem %s15, 16, [#allocation2], [#allocation4]
    $region5: #{mlp_decision_forward.1} parent=1 // pred_fallthru
      _
    // Predicated region
    $region6: #{mlp_decision_forward.1} parent=1 // pred_check
      _
    $region7: #{mlp_decision_forward.1} parent=1 // pred_check_branch
      %19 = sbr.rel (0) target = $region9
    $region8: #{mlp_decision_forward.1} parent=1 // pred_region
      _
    $region9: #{mlp_decision_forward.1} parent=1 // pred_fallthru
      _
    // Predicated region
    $region10: #{mlp_decision_forward.1} parent=1 // pred_check
      _
    $region11: #{mlp_decision_forward.1} parent=1 // pred_check_branch
      %21 = sbr.rel (0) target = $region13
    $region12: #{mlp_decision_forward.1} parent=1 // pred_region
      %23 = dma.done [#allocation4], 16
    $region13: #{mlp_decision_forward.1} parent=1 // pred_fallthru
      _
    %24 = sfence
    %s25 = sld [smem:[#allocation2]]
    %s26 = sld [smem:[#allocation2 + $0x1]]
    %s27 = sld [smem:[#allocation2 + $0x2]]
    %v28 = vld [vmem:[%s1] sm:$0x7]
    %v29 = vld [vmem:[%s1 + $0x3] sm:$0x1]
    %v30 = vstv %s25
    %v31 = vmul.f32 %v30, %v28
    %v32 = vadd.f32 %v29, %v31
    %v33 = vstv %s26
    %v34 = vmul.f32 %v33, %v28
    %v36 = vrot.slane %v34, 1
    %v38 = vadd.f32 %v32, %v36
    %v39 = vstv %s27
    %v40 = vmul.f32 %v39, %v28
    %v42 = vrot.slane %v40, 2
    %v44 = vadd.f32 %v38, %v42
    %v45 = vmax.f32 %v44, 0.0
    %v46 = vld [vmem:[%s1 + $0x8] sm:$0xff]
    %v47 = vld [vmem:[%s1 + $0x10] sm:$0xff]
    %v48 = vld [vmem:[%s1 + $0x18] sm:$0xff]
    %v49 = vld [vmem:[%s1 + $0x20] sm:$0xff]
    %v50 = vld [vmem:[%s1 + $0x4] sm:$0x1]
    %v51 = vperm.slane %v45, 0
    %v52 = vperm.slane %v50, 0
    %vm53 = vcmask 261120
    %v55 = vsel %vm53, %v51, 0
    %57 = vmatpush.msra.mxu0 0.0
    %58 = vmatpush.msra.mxu0 0.0
    %59 = vmatpush.msra.mxu0 0.0
    %60 = vmatpush.msra.mxu0 0.0
    %61 = vmatpush.msra.mxu0 0.0
    %62 = vmatpush.msra.mxu0 0.0
    %63 = vmatpush.msra.mxu0 0.0
    %64 = vmatpush.msra.mxu0 0.0
    %65 = vmatpush.msra.mxu0 0.0
    %66 = vmatpush.msra.mxu0 0.0
    %67 = vmatpush.msra.mxu0 0.0
    %68 = vmatpush.msra.mxu0 0.0
    %69 = vmatpush.msra.mxu0 %v49
    %70 = vmatpush.msra.mxu0 %v48
    %71 = vmatpush.msra.mxu0 %v47
    %72 = vmatpush.msra.mxu0 %v46
    %73 = vmatmul.f32.gmra.mxu0 %v55
    %v74 = vpop.f32.mrf.mxu0
    %v75 = vadd.f32 %v52, %v74
    %76 = vdwg.mxu0
    %v77 = vmax.f32 %v75, 0.0
    %v78 = vld [vmem:[%s1 + $0x5] sm:$0x1]
    %v79 = vld [vmem:[%s1 + $0x6] sm:$0x1]
    %v80 = vmul.f32 %v77, %v78
    %vm81 = vcmask 253952
    %v82 = vsel %vm81, %v80, 0.0
    %83 = vadd.xlane.f32.xlu0 %v82
    %v84 = vpop.xlane.xlu0 %83
    %v85 = vadd.f32 %v84, %v79
    %v86 = vmax.f32 %v85, 0.0
    %v87 = vand.u32 2147483647, %v85
    %v88 = vsub.f32 0.0, %v87
    %v89 = vmul.f32 %v88, 1.442695
    %v90 = vpow.pop %v89
    %v91 = vadd.f32 %v90, 1.0
    %v92 = vlog2.pop %v91
    %v93 = vmul.f32 %v92, 0.6931472
    %v94 = vadd.f32 %v86, %v93
    %v95 = vadd.f32 %v94, 0.0
    %s96 = vtos %v95
    %s97 = scalar_lea.smem [#allocation5], 0
    %98 = sst [smem:[%s97]] %s96
    // Predicated region
    $region14: #{mlp_decision_forward.1} parent=1 // pred_check
      _
    $region15: #{mlp_decision_forward.1} parent=1 // pred_check_branch
      %100 = sbr.rel (0) target = $region17
    $region16: #{mlp_decision_forward.1} parent=1 // pred_region
      %102 = vsyncadd [#allocation3], 0
      %s104 = sshll.u32 %s2, 4
      %s105 = int_to_ptr.hbm [resolvable:$true] %s104
      %107 = dma.smem_to_hbm [#allocation5], 16, %s105, [#allocation3]
    $region17: #{mlp_decision_forward.1} parent=1 // pred_fallthru
      _
    // Predicated region
    $region18: #{mlp_decision_forward.1} parent=1 // pred_check
      _
    $region19: #{mlp_decision_forward.1} parent=1 // pred_check_branch
      %109 = sbr.rel (0) target = $region21
    $region20: #{mlp_decision_forward.1} parent=1 // pred_region
      %111 = dma.done [#allocation3], 16
    $region21: #{mlp_decision_forward.1} parent=1 // pred_fallthru
      _
    %112 = sfence
    %113 = vsyncpa [#allocation3], 1
    %114 = vsyncpa [#allocation4], 1

</llo_original>
